<compile_context>
chip_gen: v5e
topology: v5e:2x2
jax: 0.10.0
libtpu: 0.0.40
codegen_flags: <defaults>
</compile_context>

<pallas_src>
import numpy as np
import jax
import jax.numpy as jnp
from jax.experimental import pallas as pl
from jax.experimental.pallas import tpu as pltpu


def _round_up(x, m):
    return ((x + m - 1) // m) * m


# ----------------------------------------------------------------------------
# Kernels
# ----------------------------------------------------------------------------

def _patch_embed_kernel(p_ref, w_ref, b_ref, o_ref):
    # One (tm, K) x (K, E) MXU tile, f32 accumulation, fused f32 bias add.
    acc = jnp.dot(p_ref[...], w_ref[...], preferred_element_type=jnp.float32)
    o_ref[...] = (acc + b_ref[...]).astype(o_ref.dtype)


def _patch_embed_kernel_ksplit(p_ref, w_ref, b_ref, o_ref, acc_ref):
    # Fallback for very large K*E weights: K is a reduction grid axis with an
    # f32 accumulator scratch (P3 init/finalize pattern).
    k = pl.program_id(1)

    @pl.when(k == 0)
    def _init():
        acc_ref[...] = jnp.zeros_like(acc_ref)

    acc_ref[...] += jnp.dot(p_ref[...], w_ref[...],
                            preferred_element_type=jnp.float32)

    @pl.when(k == pl.num_programs(1) - 1)
    def _finalize():
        o_ref[...] = (acc_ref[...] + b_ref[...]).astype(o_ref.dtype)


# ----------------------------------------------------------------------------
# Wrapper
# ----------------------------------------------------------------------------

def _vmem_capacity_bytes():
    # Generation-aware VMEM query; conservative (v7x per-core) fallback.
    try:
        info = pltpu.get_tpu_info()
        cap = getattr(info, "vmem_capacity_bytes", None)
        if cap:
            return int(cap)
    except Exception:
        pass
    return 64 * 1024 * 1024


def patch_embedding(x, weight, bias, patch_size, *, compute_dtype=None, kt=None):
    """x: (B, C, H, W). weight: (E, C, P, P) (PyTorch conv layout). bias: (E,).

    Returns (B, N, E), N = (H//P)*(W//P), matching
    PatchEmbedding(image_size, P, C, E, dropout=0.0).forward(x).

    compute_dtype=jnp.bfloat16 enables the bf16-input / f32-accumulate MXU
    fast path (halves the dominant HBM read stream); default keeps the input
    dtype (exact PyTorch semantics).  `kt` forces a K-split tile (testing /
    very large C*P*P).
    """
    B, C, H, W = x.shape
    E = weight.shape[0]
    P = patch_size
    GH, GW = H // P, W // P
    N = GH * GW
    K = C * P * P
    M = B * N

    out_dtype = x.dtype
    if compute_dtype is None:
        compute_dtype = x.dtype

    in_item = np.dtype(compute_dtype).itemsize
    out_item = np.dtype(out_dtype).itemsize

    cap = _vmem_capacity_bytes()
    vmem_budget = min(cap // 2, 64 * 1024 * 1024)          # tile-selection budget
    vmem_limit = min((cap * 3) // 4, 100 * 1024 * 1024)    # scoped limit for Mosaic

    # --- patch view in (C, P, P) order (matches the conv-weight layout) ------
    # No K / M / E padding copies.  allow_input_fusion (below) lets XLA fold
    # this transpose + cast into the kernel's input DMA rather than
    # materializing `patches` in HBM.
    patches = x.reshape(B, C, GH, P, GW, P)
    patches = jnp.transpose(patches, (0, 2, 4, 1, 3, 5)).reshape(M, K)
    patches = patches.astype(compute_dtype)
    w_flat = weight.reshape(E, K).T.astype(compute_dtype)   # (K, E), small
    b_row = bias.astype(jnp.float32).reshape(1, E)           # f32 bias row

    # --- row-tile selection (VMEM-budgeted, generation aware) ----------------
    def fits_full_k(tm_):
        return (2 * tm_ * K * in_item        # patch tile (double-buffered)
                + K * E * in_item            # resident weight (single-buffered)
                + 2 * tm_ * E * out_item     # output tile (double-buffered)
                + 2 * tm_ * E * 4            # f32 matmul intermediate (+margin)
                + E * 4) <= vmem_budget

    def cap_tm(tm_):
        # >= 2 blocks on the "parallel" M axis so both v7x TensorCores get
        # work (negligible cost on single-core v5e/v6e); a single full-extent
        # block when M is tiny (block dim == array dim is always legal).
        tm_ = min(tm_, max(8, _round_up(pl.cdiv(M, 2), 8)))
        return M if tm_ >= M else tm_

    tm = 512
    while tm > 8 and not fits_full_k(tm):
        tm //= 2

    use_ksplit = (kt is not None and kt < K) or not fits_full_k(8)

    if not use_ksplit:
        tm = cap_tm(tm)
        num_m = pl.cdiv(M, tm)
        out = pl.pallas_call(
            _patch_embed_kernel,
            out_shape=jax.ShapeDtypeStruct((M, E), out_dtype),
            grid_spec=pltpu.PrefetchScalarGridSpec(
                num_scalar_prefetch=0,
                grid=(num_m,),
                in_specs=[
                    # Patch-row tile; last block may overhang M (masked).
                    pl.BlockSpec((tm, K), lambda i: (i, 0)),
                    # Full weight, resident and single-buffered.
                    pl.BlockSpec((K, E), lambda i: (0, 0),
                                 pipeline_mode=pl.Buffered(1)),
                    # f32 bias row, resident and single-buffered.
                    pl.BlockSpec((1, E), lambda i: (0, 0),
                                 pipeline_mode=pl.Buffered(1)),
                ],
                out_specs=pl.BlockSpec((tm, E), lambda i: (i, 0)),
            ),
            compiler_params=pltpu.CompilerParams(
                dimension_semantics=("parallel",),
                vmem_limit_bytes=vmem_limit,
                allow_input_fusion=[True, False, False],
            ),
        )(patches, w_flat, b_row)
    else:
        # ---- K-split fallback: reduction axis + accumulator scratch ---------
        if kt is None:
            kt = 512
        kt = max(128, (int(kt) // 128) * 128)
        kt = min(kt, _round_up(K, 128))

        def fits_split(tm_, kt_):
            return (2 * tm_ * kt_ * in_item   # patch tile
                    + 2 * kt_ * E * in_item   # weight tile (double-buffered)
                    + 2 * tm_ * E * out_item  # output tile
                    + tm_ * E * 4             # accumulator scratch
                    + 2 * tm_ * E * 4         # f32 matmul intermediate
                    + E * 4) <= vmem_budget

        while kt > 128 and not fits_split(8, kt):
            kt //= 2
        tm = 512
        while tm > 8 and not fits_split(tm, kt):
            tm //= 2
        tm = cap_tm(tm)

        # Reduction blocks must not overhang K (garbage would be accumulated),
        # so zero-pad K up to a multiple of kt when needed (zeros are inert).
        K_p = _round_up(K, kt)
        if K_p != K:
            patches = jnp.pad(patches, ((0, 0), (0, K_p - K)))
            w_flat = jnp.pad(w_flat, ((0, K_p - K), (0, 0)))

        num_m = pl.cdiv(M, tm)
        num_k = K_p // kt
        out = pl.pallas_call(
            _patch_embed_kernel_ksplit,
            out_shape=jax.ShapeDtypeStruct((M, E), out_dtype),
            grid_spec=pltpu.PrefetchScalarGridSpec(
                num_scalar_prefetch=0,
                grid=(num_m, num_k),
                in_specs=[
                    pl.BlockSpec((tm, kt), lambda i, k: (i, k)),
                    pl.BlockSpec((kt, E), lambda i, k: (k, 0)),
                    pl.BlockSpec((1, E), lambda i, k: (0, 0),
                                 pipeline_mode=pl.Buffered(1)),
                ],
                out_specs=pl.BlockSpec((tm, E), lambda i, k: (i, 0)),
                scratch_shapes=[pltpu.VMEM((tm, E), jnp.float32)],
            ),
            compiler_params=pltpu.CompilerParams(
                dimension_semantics=("parallel", "arbitrary"),
                vmem_limit_bytes=vmem_limit,
                allow_input_fusion=[True, False, False],
            ),
        )(patches, w_flat, b_row)

    # Dropout2d(p=0.0) is the identity; nothing to do.
    # TODO(synk): nonzero dropout would need pltpu.prng_seed/prng_random_bits masking.
    return out.reshape(B, N, E)


# ----------------------------------------------------------------------------
# Reference + self-test
# ----------------------------------------------------------------------------

def _reference(x, weight, bias, patch_size):
    # Plain-JAX reference using a real strided convolution (NCHW / OIHW).
    y = jax.lax.conv_general_dilated(
        x, weight,
        window_strides=(patch_size, patch_size),
        padding="VALID",
        dimension_numbers=("NCHW", "OIHW", "NCHW"),
    ) + bias.reshape(1, -1, 1, 1)
    B, E, GH, GW = y.shape
    return jnp.transpose(y.reshape(B, E, GH * GW), (0, 2, 1))


def _make_case(key, B, C, H, W, P, E):
    kx, kw, kb = jax.random.split(key, 3)
    x = jax.random.normal(kx, (B, C, H, W), dtype=jnp.float32)
    fan_in = C * P * P
    bound = 1.0 / (fan_in ** 0.5)
    weight = jax.random.uniform(kw, (E, C, P, P), jnp.float32, -bound, bound)
    bias = jax.random.uniform(kb, (E,), jnp.float32, -bound, bound)
    return x, weight, bias


if __name__ == "__main__":
    key = jax.random.PRNGKey(0)
    k1, k2, k3 = jax.random.split(key, 3)

    # Case 1: module-default-ish shapes (image 16, patch 4, C=4, E=32, B=2), f32 exact.
    x, w, b = _make_case(k1, 2, 4, 16, 16, 4, 32)
    ref = _reference(x, w, b, 4)
    out = patch_embedding(x, w, b, 4)
    jax.block_until_ready(out)
    assert out.shape == (2, 16, 32), out.shape
    assert jnp.allclose(out, ref, atol=1e-5, rtol=1e-5), float(
        jnp.max(jnp.abs(out - ref)))

    # Case 2: bf16-compute / f32-accumulate fast path, loose tolerance.
    out_bf16 = patch_embedding(x, w, b, 4, compute_dtype=jnp.bfloat16)
    jax.block_until_ready(out_bf16)
    assert jnp.allclose(out_bf16, ref, atol=5e-2, rtol=5e-2), float(
        jnp.max(jnp.abs(out_bf16 - ref)))

    # Case 3: M not a multiple of the row tile -> exercises the masked partial block.
    x3, w3, b3 = _make_case(k2, 2, 4, 20, 20, 4, 32)
    ref3 = _reference(x3, w3, b3, 4)
    out3 = patch_embedding(x3, w3, b3, 4)
    jax.block_until_ready(out3)
    assert jnp.allclose(out3, ref3, atol=1e-5, rtol=1e-5), float(
        jnp.max(jnp.abs(out3 - ref3)))

    # Case 4: forced K-split (reduction grid axis + f32 accumulator scratch).
    x4, w4, b4 = _make_case(k3, 1, 2, 32, 32, 16, 32)
    ref4 = _reference(x4, w4, b4, 16)
    out4 = patch_embedding(x4, w4, b4, 16, kt=256)
    jax.block_until_ready(out4)
    assert jnp.allclose(out4, ref4, atol=1e-4, rtol=1e-4), float(
        jnp.max(jnp.abs(out4 - ref4)))

    print("KERNEL_OK")
</pallas_src>

<mosaic_0001>
module attributes {stable_mosaic.version = 11 : i64} {
  func.func @_patch_embed_kernel(%arg0: i32, %arg1: memref<16x64xf32, #tpu.memory_space<vmem>>, %arg2: memref<64x32xf32, #tpu.memory_space<vmem>>, %arg3: memref<1x32xf32, #tpu.memory_space<vmem>>, %arg4: memref<16x32xf32, #tpu.memory_space<vmem>>) attributes {dimension_semantics = [#tpu.dimension_semantics<parallel>], iteration_bounds = array<i64: 2>, scalar_prefetch = 0 : i64, scratch_operands = 0 : i64, tpu.core_type = #tpu.core_type<tc>, window_params = [{transform_indices = @transform_0, window_bounds = array<i64: 16, 64>}, {pipeline_mode = #tpu.pipeline_mode<synchronous>, transform_indices = @transform_1, window_bounds = array<i64: 64, 32>}, {pipeline_mode = #tpu.pipeline_mode<synchronous>, transform_indices = @transform_2, window_bounds = array<i64: 1, 32>}, {transform_indices = @transform_3, window_bounds = array<i64: 16, 32>}]} {
    %c0 = arith.constant 0 : index
    %c0_0 = arith.constant 0 : index
    %0 = vector.load %arg1[%c0, %c0_0] : memref<16x64xf32, #tpu.memory_space<vmem>>, vector<16x64xf32>
    %c0_1 = arith.constant 0 : index
    %c0_2 = arith.constant 0 : index
    %1 = vector.load %arg2[%c0_1, %c0_2] : memref<64x32xf32, #tpu.memory_space<vmem>>, vector<64x32xf32>
    %cst = arith.constant dense<0.000000e+00> : vector<16x32xf32>
    %2 = tpu.matmul %0, %1, %cst {dimension_numbers = #tpu.dot_dimension_numbers<[1], [0], [0], [1], [0, 0, 1, 1], [], []>} : vector<16x64xf32>, vector<64x32xf32>, vector<16x32xf32> -> vector<16x32xf32>
    %c0_3 = arith.constant 0 : index
    %c0_4 = arith.constant 0 : index
    %3 = vector.load %arg3[%c0_3, %c0_4] : memref<1x32xf32, #tpu.memory_space<vmem>>, vector<1x32xf32>
    %4 = vector.broadcast %3 : vector<1x32xf32> to vector<16x32xf32>
    %5 = arith.addf %2, %4 : vector<16x32xf32>
    %c0_5 = arith.constant 0 : index
    %c0_6 = arith.constant 0 : index
    %6 = vector.load %arg4[%c0_5, %c0_6] : memref<16x32xf32, #tpu.memory_space<vmem>>, vector<16x32xf32>
    tpu.vector_store %arg4[%c0_5, %c0_6], %5 {strides = array<i32>} : memref<16x32xf32, #tpu.memory_space<vmem>>, vector<16x32xf32>,
    return
  }
  func.func @transform_0(%arg0: i32) -> (i32, i32) {
    %c0_i32 = arith.constant 0 : i32
    %c0_i32_0 = arith.constant 0 : i32
    return %arg0, %c0_i32 : i32, i32
  }
  func.func @transform_1(%arg0: i32) -> (i32, i32) {
    %c0_i32 = arith.constant 0 : i32
    %c0_i32_0 = arith.constant 0 : i32
    %c0_i32_1 = arith.constant 0 : i32
    return %c0_i32, %c0_i32_0 : i32, i32
  }
  func.func @transform_2(%arg0: i32) -> (i32, i32) {
    %c0_i32 = arith.constant 0 : i32
    %c0_i32_0 = arith.constant 0 : i32
    %c0_i32_1 = arith.constant 0 : i32
    return %c0_i32, %c0_i32_0 : i32, i32
  }
  func.func @transform_3(%arg0: i32) -> (i32, i32) {
    %c0_i32 = arith.constant 0 : i32
    %c0_i32_0 = arith.constant 0 : i32
    return %arg0, %c0_i32 : i32, i32
  }
}

</mosaic_0001>

<llo_original>
// kernel: tpu_custom_call.1
$region0: #{tpu_custom_call.1}
  #allocation0 [shape = 'u32[]', space=smem, size = 0x4, offset = 0x4, fixed_abs, tag = 'smem constant byte address 0x4 - core index']
  #allocation1 [shape = 'u32[72,128]{1,0:T(1,128)}', space=vmem, size = 0x9000, scoped, tag = 'internal scratch']
  %s0 = inlined_call_operand.vmem [shape: f32[32,64], index: 0, kind: input, shape index: {}]
  %s1 = inlined_call_operand.vmem [shape: f32[64,32], index: 1, kind: input, shape index: {}]
  %s2 = inlined_call_operand.vmem [shape: f32[1,32], index: 2, kind: input, shape index: {}]
  %s3 = inlined_call_operand.hbm [shape: f32[32,32], index: 3, kind: output, shape index: {}]
  %s4 = sld [smem:[#allocation0]]
  $region45: #{tpu_custom_call.1} parent=0
    _
  %s6 = ssub.s32 1, %s4
  %s7 = scalar_select 0, %s6, %s4
  $region1: #{tpu_custom_call.1} parent=0
    #allocation2 [shape = 'u8[16384]{0}', space=vmem, size = 0x4000, scoped, tag = 'output window, operand 0']
    #allocation3 [shape = 's32[2]{0}', space=sflag, size = 0x8, scoped, tag = 'scoped memory for tpu_custom_call.1']
    %8 = vsyncpa [#allocation3], 0
    %s9 = scalar_lea.sflag [#allocation3], 1
    %10 = vsyncpa %s9, 0
    loop: start=0, step=1, limit=4
    $region2: #{tpu_custom_call.1} parent=1 // loop_pre_header
      _
    $region3: #{tpu_custom_call.1} parent=1 // loop_header
      %s12 = sphi 0, %s16
      %p13 = scmp.ge.s32.totalorder %s12, 4
      %s22 = sphi 0, %s24
      %s25 = sphi 0, %s22
      %s26 = sphi 0, %s25
      %s42 = sphi 0, %s26
      %s46 = sphi 0, %s46
      %s48 = sphi 0, %s46
      %s49 = sphi 0, %s48
      %s63 = sphi 0, %s49
      %s67 = sphi 0, %s67
      %s69 = sphi 0, %s67
      %s70 = sphi 0, %s69
      %s84 = sphi 0, %s70
      %s90 = sphi 0, %s92
      %s93 = sphi 0, %s90
      %s94 = sphi 0, %s93
      %s110 = sphi 0, %s94
    $region4: #{tpu_custom_call.1} parent=1 // loop_header_branch
      %15 = sbr.rel (%p13) target = $region8
    $region5: #{tpu_custom_call.1} parent=1 // loop_body
      %s17 = ssub.s32 %s12, 1
      %s18 = ssub.s32 %s12, 2
      %s19 = sadd.s32 %s12, 1
      %s20 = ssub.s32 %s12, %s19
      %p21 = scmp.eq.s32.totalorder %s20, 0
      %s23 = sadd.s32 %s22, 1
      %s24 = scalar_select %p21, %s22, %s23
      %p27 = pneg %p21
      %p28 = scmp.eq.s32.totalorder %s12, 1
      %p29 = por %p27, %p28
      %p30 = scmp.ne.s32.totalorder %s22, %s25
      %p31 = scmp.eq.s32.totalorder %s12, 0
      %p32 = por %p30, %p31
      %p33 = scmp.ne.s32.totalorder %s22, %s25
      %p34 = scmp.eq.s32.totalorder %s17, 1
      %p35 = por %p33, %p34
      %p36 = scmp.ne.s32.totalorder %s25, %s26
      %p37 = scmp.eq.s32.totalorder %s17, 0
      %p38 = por %p36, %p37
      %p39 = scmp.ne.s32.totalorder %s25, %s26
      %p40 = scmp.eq.s32.totalorder %s18, 1
      %p41 = por %p39, %p40
      %p43 = scmp.ne.s32.totalorder %s26, %s42
      %p44 = scmp.eq.s32.totalorder %s18, 0
      %p45 = por %p43, %p44
      %s47 = sadd.s32 %s46, 1
      %p50 = scmp.eq.s32.totalorder %s12, 1
      %p51 = scmp.ne.s32.totalorder %s46, %s48
      %p52 = scmp.eq.s32.totalorder %s12, 0
      %p53 = por %p51, %p52
      %p54 = scmp.ne.s32.totalorder %s46, %s48
      %p55 = scmp.eq.s32.totalorder %s17, 1
      %p56 = por %p54, %p55
      %p57 = scmp.ne.s32.totalorder %s48, %s49
      %p58 = scmp.eq.s32.totalorder %s17, 0
      %p59 = por %p57, %p58
      %p60 = scmp.ne.s32.totalorder %s48, %s49
      %p61 = scmp.eq.s32.totalorder %s18, 1
      %p62 = por %p60, %p61
      %p64 = scmp.ne.s32.totalorder %s49, %s63
      %p65 = scmp.eq.s32.totalorder %s18, 0
      %p66 = por %p64, %p65
      %s68 = sadd.s32 %s67, 1
      %p71 = scmp.eq.s32.totalorder %s12, 1
      %p72 = scmp.ne.s32.totalorder %s67, %s69
      %p73 = scmp.eq.s32.totalorder %s12, 0
      %p74 = por %p72, %p73
      %p75 = scmp.ne.s32.totalorder %s67, %s69
      %p76 = scmp.eq.s32.totalorder %s17, 1
      %p77 = por %p75, %p76
      %p78 = scmp.ne.s32.totalorder %s69, %s70
      %p79 = scmp.eq.s32.totalorder %s17, 0
      %p80 = por %p78, %p79
      %p81 = scmp.ne.s32.totalorder %s69, %s70
      %p82 = scmp.eq.s32.totalorder %s18, 1
      %p83 = por %p81, %p82
      %p85 = scmp.ne.s32.totalorder %s70, %s84
      %p86 = scmp.eq.s32.totalorder %s18, 0
      %p87 = por %p85, %p86
      %s88 = ssub.s32 %s12, %s19
      %p89 = scmp.eq.s32.totalorder %s88, 0
      %s91 = sadd.s32 %s90, 1
      %s92 = scalar_select %p89, %s90, %s91
      %p95 = pneg %p89
      %p96 = scmp.eq.s32.totalorder %s12, 1
      %p97 = por %p95, %p96
      %p98 = scmp.ne.s32.totalorder %s90, %s93
      %p99 = scmp.eq.s32.totalorder %s12, 0
      %p100 = por %p98, %p99
      %p101 = scmp.ne.s32.totalorder %s90, %s93
      %p102 = scmp.eq.s32.totalorder %s17, 1
      %p103 = por %p101, %p102
      %p104 = scmp.ne.s32.totalorder %s93, %s94
      %p105 = scmp.eq.s32.totalorder %s17, 0
      %p106 = por %p104, %p105
      %p107 = scmp.ne.s32.totalorder %s93, %s94
      %p108 = scmp.eq.s32.totalorder %s18, 1
      %p109 = por %p107, %p108
      %p111 = scmp.ne.s32.totalorder %s94, %s110
      %p112 = scmp.eq.s32.totalorder %s18, 0
      %p113 = por %p111, %p112
      %p114 = scmp.le.s32.totalorder 1, %s12
      %p115 = scmp.lt.s32.totalorder %s12, 3
      %p116 = pnand %p114, %p115
      %p117 = pneg %p116
      // Predicated region
      $region9: #{tpu_custom_call.1} parent=5 // pred_check
        _
      $region10: #{tpu_custom_call.1} parent=5 // pred_check_branch
        %119 = sbr.rel (%p116) target = $region12
      $region11: #{tpu_custom_call.1} parent=5 // pred_region
        %s120 = ssub.s32 %s12, 1
        // Predicated region
        $region13: #{tpu_custom_call.1} parent=11 // pred_check
          %p121 = pneg %p59
        $region14: #{tpu_custom_call.1} parent=11 // pred_check_branch
          %123 = sbr.rel (%p121) target = $region16
        $region15: #{tpu_custom_call.1} parent=11 // pred_region
          _
        $region16: #{tpu_custom_call.1} parent=11 // pred_fallthru
          _
        // Predicated region
        $region17: #{tpu_custom_call.1} parent=11 // pred_check
          %p124 = pneg %p80
        $region18: #{tpu_custom_call.1} parent=11 // pred_check_branch
          %126 = sbr.rel (%p124) target = $region20
        $region19: #{tpu_custom_call.1} parent=11 // pred_region
          _
        $region20: #{tpu_custom_call.1} parent=11 // pred_fallthru
          _
      $region12: #{tpu_custom_call.1} parent=5 // pred_fallthru
        _
      %p127 = scmp.lt.s32.totalorder %s12, 2
      // Predicated region
      $region21: #{tpu_custom_call.1} parent=5 // pred_check
        %p128 = pneg %p127
      $region22: #{tpu_custom_call.1} parent=5 // pred_check_branch
        %130 = sbr.rel (%p128) target = $region24
      $region23: #{tpu_custom_call.1} parent=5 // pred_region
        // Predicated region
        $region25: #{tpu_custom_call.1} parent=23 // pred_check
          %p131 = pneg %p32
        $region26: #{tpu_custom_call.1} parent=23 // pred_check_branch
          %133 = sbr.rel (%p131) target = $region28
        $region27: #{tpu_custom_call.1} parent=23 // pred_region
          %s134 = smul.u32 2, %s12
          %p135 = scmp.lt.s32.totalorder %s134, 3
          %s136 = scalar_select %p135, %s134, 3
          %s137 = smul.addr %s136, 8
          %s138 = scalar_lea.vmem %s0, %s137
          %s139 = smul.u32 2, %s12
        $region28: #{tpu_custom_call.1} parent=23 // pred_fallthru
          _
      $region24: #{tpu_custom_call.1} parent=5 // pred_fallthru
        _
      %p140 = scmp.le.s32.totalorder 1, %s12
      %p141 = scmp.lt.s32.totalorder %s12, 3
      %p142 = pnand %p140, %p141
      %p143 = pneg %p142
      // Predicated region
      $region29: #{tpu_custom_call.1} parent=5 // pred_check
        _
      $region30: #{tpu_custom_call.1} parent=5 // pred_check_branch
        %145 = sbr.rel (%p142) target = $region32
      $region31: #{tpu_custom_call.1} parent=5 // pred_region
        %s146 = ssub.s32 %s12, 1
        %s147 = smul.u32 2, %s17
        %p148 = scmp.lt.s32.totalorder %s147, 3
        %s149 = scalar_select %p148, %s147, 3
        %s150 = smul.addr %s149, 8
        %s151 = scalar_lea.vmem %s0, %s150
        %p152 = pneg %p38
        %p153 = pneg %p35
        %p154 = pneg %p59
        %p155 = pneg %p56
        %p156 = pneg %p80
        %p157 = pneg %p77
        %p158 = pneg %p106
        %p159 = pneg %p103
        %s160 = sand.u32 %s93, 1
        %s161 = scalar_lea.sflag [#allocation3], %s160
        %s162 = sand.u32 %s93, 1
        %s163 = smul.addr %s162, 16
        %s164 = scalar_lea.vmem [#allocation2], %s163
        %s165 = smul.u32 2, %s17
        %p166 = scmp.lt.s32.totalorder %s165, 3
        %s167 = scalar_select %p166, %s165, 3
        %s168 = smul.addr %s167, 8
        %s169 = scalar_lea.vmem %s0, %s168
        %s170 = smul.u32 2, %s17
        %s171 = smul.u32 2, %s17
        %v172 = vld [vmem:[%s169] sm:$0xff]
        %v173 = vld [vmem:[%s169 + $0x8] sm:$0xff]
        %v174 = vld [vmem:[%s1] sm:$0xff]
        %v175 = vld [vmem:[%s1 + $0x8] sm:$0xff]
        %v176 = vld [vmem:[%s1 + $0x10] sm:$0xff]
        %v177 = vld [vmem:[%s1 + $0x18] sm:$0xff]
        %v178 = vld [vmem:[%s1 + $0x20] sm:$0xff]
        %v179 = vld [vmem:[%s1 + $0x28] sm:$0xff]
        %v180 = vld [vmem:[%s1 + $0x30] sm:$0xff]
        %v181 = vld [vmem:[%s1 + $0x38] sm:$0xff]
        %v182 = vld [vmem:[%s2] sm:$0x1]
        %v184 = vperm.slane %v182, 0
        %vm186 = vcmask 523264
        %v188 = vsel %vm186, %v172, 0
        %v191 = vsel %vm186, %v173, 0
        %193 = vmatpush.msra.mxu0 0.0
        %194 = vmatpush.msra.mxu0 0.0
        %195 = vmatpush.msra.mxu0 0.0
        %196 = vmatpush.msra.mxu0 0.0
        %197 = vmatpush.msra.mxu0 0.0
        %198 = vmatpush.msra.mxu0 0.0
        %199 = vmatpush.msra.mxu0 0.0
        %200 = vmatpush.msra.mxu0 0.0
        %201 = vmatpush.msra.mxu0 %v181
        %202 = vmatpush.msra.mxu0 %v180
        %203 = vmatpush.msra.mxu0 %v179
        %204 = vmatpush.msra.mxu0 %v178
        %205 = vmatpush.msra.mxu0 %v177
        %206 = vmatpush.msra.mxu0 %v176
        %207 = vmatpush.msra.mxu0 %v175
        %208 = vmatpush.msra.mxu0 %v174
        %209 = vmatmul.f32.gmra.mxu0 %v188
        %v210 = vpop.f32.mrf.mxu0
        %v211 = vadd.f32 %v184, %v210
        %212 = vmatmul.f32.gmra.mxu0 %v191
        %v213 = vpop.f32.mrf.mxu0
        %v214 = vadd.f32 %v184, %v213
        %215 = vdwg.mxu0
        %vm216 = vcmask 261120
        %217 = vst.msk [vmem:[%s164] sm:$0xff] %vm216, %v211
        %218 = vst.msk [vmem:[%s164 + $0x8] sm:$0xff] %vm216, %v214
        %s219 = sand.u32 %s93, 1
        %s220 = scalar_lea.sflag [#allocation3], %s219
        %s221 = sand.u32 %s93, 1
        %s222 = smul.addr %s221, 16
        %s223 = scalar_lea.vmem [#allocation2], %s222
        // Predicated region
        $region33: #{tpu_custom_call.1} parent=31 // pred_check
          %p224 = pneg %p103
        $region34: #{tpu_custom_call.1} parent=31 // pred_check_branch
          %226 = sbr.rel (%p224) target = $region36
        $region35: #{tpu_custom_call.1} parent=31 // pred_region
          %s227 = smul.u32 2, %s17
          %229 = vsyncadd %s220, 0
          %s230 = smul.addr %s227, 8
          %s231 = scalar_lea.hbm %s3, %s230
          %s232 = sshll.u32 %s223, 4
          %s233 = int_to_ptr.vmem [resolvable:$true] %s232
          %s234 = sshll.u32 %s231, 4
          %s235 = int_to_ptr.hbm [resolvable:$true] %s234
          %240 = dma.vmem_to_hbm [thread:$0]  %s233, 256, %s235, %s220, 128, 128, 8
        $region36: #{tpu_custom_call.1} parent=31 // pred_fallthru
          _
      $region32: #{tpu_custom_call.1} parent=5 // pred_fallthru
        _
      %p241 = scmp.le.s32.totalorder 2, %s12
      // Predicated region
      $region37: #{tpu_custom_call.1} parent=5 // pred_check
        %p242 = pneg %p241
      $region38: #{tpu_custom_call.1} parent=5 // pred_check_branch
        %244 = sbr.rel (%p242) target = $region40
      $region39: #{tpu_custom_call.1} parent=5 // pred_region
        %s245 = ssub.s32 %s12, 2
        // Predicated region
        $region41: #{tpu_custom_call.1} parent=39 // pred_check
          %p246 = pneg %p109
        $region42: #{tpu_custom_call.1} parent=39 // pred_check_branch
          %248 = sbr.rel (%p246) target = $region44
        $region43: #{tpu_custom_call.1} parent=39 // pred_region
          %s249 = sand.u32 %s94, 1
          %s250 = scalar_lea.sflag [#allocation3], %s249
          %s251 = sand.u32 %s94, 1
          %s252 = smul.addr %s251, 16
          %s253 = scalar_lea.vmem [#allocation2], %s252
          %255 = dma.done %s250, 256
        $region44: #{tpu_custom_call.1} parent=39 // pred_fallthru
          _
      $region40: #{tpu_custom_call.1} parent=5 // pred_fallthru
        _
    $region6: #{tpu_custom_call.1} parent=1 // loop_footer
      %s16 = sadd.s32 1, %s12
    $region7: #{tpu_custom_call.1} parent=1 // loop_footer_branch
      %11 = sbr.rel target = $region3
    $region8: #{tpu_custom_call.1} parent=1 // loop_exit
      _
    %256 = vsyncpa [#allocation3], 1
    %s257 = scalar_lea.sflag [#allocation3], 1
    %258 = vsyncpa %s257, 1

</llo_original>
